<compile_context>
chip_gen: v7x
topology: tpu7x:2x2x1
jax: 0.10.0
libtpu: 0.0.40
codegen_flags: <defaults>
</compile_context>

<pallas_src>
import functools

import jax
import jax.numpy as jnp
from jax import lax
from jax.experimental import pallas as pl
from jax.experimental.pallas import tpu as pltpu


def _pick_tile(dim, candidates):
    """Largest candidate that divides dim, else the full dim."""
    for c in candidates:
        if dim % c == 0:
            return c
    return dim


# ----------------------------------------------------------------------------
# Tiled linear:  y = x @ w.T + b   (w kept in torch (Nout, K) layout)
# ----------------------------------------------------------------------------
def _linear_kernel(x_ref, w_ref, b_ref, o_ref, acc_ref):
    # x_ref: (tm, tk), w_ref: (tn, tk), b_ref: (1, tn), o_ref: (tm, tn).
    @pl.when(pl.program_id(2) == 0)
    def _():
        acc_ref[...] = jnp.zeros_like(acc_ref)

    # Contract x's last dim with w's last dim -> no transpose of the weight.
    acc_ref[...] += lax.dot_general(
        x_ref[...], w_ref[...],
        dimension_numbers=(((1,), (1,)), ((), ())),
        preferred_element_type=jnp.float32)

    @pl.when(pl.program_id(2) == pl.num_programs(2) - 1)
    def _():
        o_ref[...] = (
            acc_ref[...] + b_ref[...].astype(jnp.float32)
        ).astype(o_ref.dtype)


def linear(x2d, w, b):
    """x2d: (M, K), w: (Nout, K) torch layout, b: (Nout,) -> (M, Nout)."""
    M, K = x2d.shape
    Nout, K2 = w.shape
    assert K == K2
    tm = _pick_tile(M, (512, 256, 128))
    tn = _pick_tile(Nout, (512, 256, 128))
    tk = _pick_tile(K, (512, 256, 128))
    grid = (M // tm, Nout // tn, K // tk)
    return pl.pallas_call(
        _linear_kernel,
        out_shape=jax.ShapeDtypeStruct((M, Nout), x2d.dtype),
        grid=grid,
        in_specs=[
            pl.BlockSpec((tm, tk), lambda i, j, k: (i, k)),
            pl.BlockSpec((tn, tk), lambda i, j, k: (j, k)),
            pl.BlockSpec((1, tn), lambda i, j, k: (0, j)),
        ],
        out_specs=pl.BlockSpec((tm, tn), lambda i, j, k: (i, j)),
        scratch_shapes=[pltpu.VMEM((tm, tn), jnp.float32)],
        compiler_params=pltpu.CompilerParams(
            dimension_semantics=("parallel", "parallel", "arbitrary")),
    )(x2d, w, b.reshape(1, Nout))


# ----------------------------------------------------------------------------
# Attention core: all heads per grid step, grid over batch only.
# ----------------------------------------------------------------------------
def _attn_kernel(qkv_ref, bias_ref, o_ref, *, scale, num_heads, head_dim,
                 all_head_dim):
    D, AHD = head_dim, all_head_dim
    outs = []
    for h in range(num_heads):          # static unroll; all heads this step
        q = qkv_ref[0, :, pl.ds(h * D, D)] * scale                    # (N, D)
        k = qkv_ref[0, :, pl.ds(AHD + h * D, D)]                      # (N, D)
        v = qkv_ref[0, :, pl.ds(2 * AHD + h * D, D)]                  # (N, D)

        # scores: contract on D directly on the MXU (no k.T materialization)
        s = lax.dot_general(q, k, (((1,), (1,)), ((), ())),
                            preferred_element_type=jnp.float32)       # (N, N)
        s = s + bias_ref[0, h].astype(jnp.float32)                    # + bias
        s = s - jnp.max(s, axis=-1, keepdims=True)                    # softmax
        p = jnp.exp(s)
        l = jnp.sum(p, axis=-1, keepdims=True)

        o = lax.dot_general(p.astype(v.dtype), v, (((1,), (0,)), ((), ())),
                            preferred_element_type=jnp.float32)       # (N, D)
        # normalize AFTER the PV matmul: N*D multiplies instead of N*N divides
        outs.append(o * pl.reciprocal(l, approx=False))

    # Single lane-dense (N, AHD) store; heads concatenated along channels,
    # equivalent to (attn @ v).transpose(1, 2).reshape(B, N, -1).
    o_ref[0] = jnp.concatenate(outs, axis=-1).astype(o_ref.dtype)


def attention_core(qkv, rel_pos_bias, scale, num_heads, head_dim,
                   all_head_dim):
    """qkv: (B, N, 3*AHD); rel_pos_bias: (1, H, N, N) -> (B, N, AHD)."""
    B, N, _ = qkv.shape
    kernel = functools.partial(_attn_kernel, scale=scale, num_heads=num_heads,
                               head_dim=head_dim, all_head_dim=all_head_dim)
    return pl.pallas_call(
        kernel,
        out_shape=jax.ShapeDtypeStruct((B, N, all_head_dim), qkv.dtype),
        grid=(B,),
        in_specs=[
            pl.BlockSpec((1, N, 3 * all_head_dim), lambda b: (b, 0, 0)),
            # constant block index -> bias stays resident across batch steps
            pl.BlockSpec((1, num_heads, N, N), lambda b: (0, 0, 0, 0)),
        ],
        out_specs=pl.BlockSpec((1, N, all_head_dim), lambda b: (b, 0, 0)),
        compiler_params=pltpu.CompilerParams(
            dimension_semantics=("parallel",)),
    )(qkv, rel_pos_bias)


# ----------------------------------------------------------------------------
# Full forward (glue in plain JAX, hot paths in Pallas; no XLA-side permutes)
# ----------------------------------------------------------------------------
def attention_forward(x, params, rel_pos_bias, num_heads):
    B, N, C = x.shape
    q_bias = params["q_bias"]             # (all_head_dim,)
    v_bias = params["v_bias"]             # (all_head_dim,)
    all_head_dim = q_bias.shape[0]
    head_dim = all_head_dim // num_heads
    scale = head_dim ** (-0.5)

    # qkv_bias = cat(q_bias, zeros_like(v_bias), v_bias)
    qkv_bias = jnp.concatenate([q_bias, jnp.zeros_like(v_bias), v_bias])

    # qkv = F.linear(x, qkv.weight, qkv_bias)  -- weight kept in torch layout
    qkv = linear(x.reshape(B * N, C), params["qkv_weight"], qkv_bias)
    qkv = qkv.reshape(B, N, 3 * all_head_dim)   # free reshape; no 5-D permute

    if rel_pos_bias is None:
        rel_pos_bias = jnp.zeros((1, num_heads, N, N), qkv.dtype)

    # softmax((q*scale) @ k^T + rel_pos_bias) @ v, heads merged per grid step
    out = attention_core(qkv, rel_pos_bias, scale, num_heads, head_dim,
                         all_head_dim)          # (B, N, AHD), already merged

    # x = self.proj(x)
    y = linear(out.reshape(B * N, all_head_dim),
               params["proj_weight"], params["proj_bias"])
    return y.reshape(B, N, C)


# Pure-JAX reference for correctness checking.
def reference_forward(x, params, rel_pos_bias, num_heads):
    B, N, C = x.shape
    q_bias = params["q_bias"]
    v_bias = params["v_bias"]
    all_head_dim = q_bias.shape[0]
    head_dim = all_head_dim // num_heads
    scale = head_dim ** (-0.5)
    qkv_bias = jnp.concatenate([q_bias, jnp.zeros_like(v_bias), v_bias])
    qkv = x @ params["qkv_weight"].T + qkv_bias
    qkv = qkv.reshape(B, N, 3, num_heads, head_dim).transpose(2, 0, 3, 1, 4)
    q, k, v = qkv[0] * scale, qkv[1], qkv[2]
    attn = jnp.einsum("bhqd,bhkd->bhqk", q, k) + rel_pos_bias
    attn = jax.nn.softmax(attn, axis=-1)
    out = jnp.einsum("bhqk,bhkd->bhqd", attn, v)
    out = out.transpose(0, 2, 1, 3).reshape(B, N, all_head_dim)
    return out @ params["proj_weight"].T + params["proj_bias"]


# ----------------------------------------------------------------------------
if __name__ == "__main__":
    B, N, C, H = 2, 8, 32, 4          # dim=32, num_heads=4, head_dim=8
    key = jax.random.PRNGKey(0)
    ks = jax.random.split(key, 7)

    x = jax.random.normal(ks[0], (B, N, C), jnp.float32)
    rel_pos_bias = 0.1 * jax.random.normal(ks[1], (1, H, N, N), jnp.float32)

    # Deterministic synthetic parameters (module-defined shapes).
    params = {
        "qkv_weight": 0.05 * jax.random.normal(ks[2], (3 * C, C), jnp.float32),
        "q_bias": 0.02 * jax.random.normal(ks[3], (C,), jnp.float32),
        "v_bias": 0.02 * jax.random.normal(ks[4], (C,), jnp.float32),
        "proj_weight": 0.05 * jax.random.normal(ks[5], (C, C), jnp.float32),
        "proj_bias": 0.02 * jax.random.normal(ks[6], (C,), jnp.float32),
    }

    out = attention_forward(x, params, rel_pos_bias, H)
    out = jax.block_until_ready(out)

    ref = reference_forward(x, params, rel_pos_bias, H)
    assert out.shape == (B, N, C)
    assert jnp.allclose(out, ref, atol=1e-4, rtol=1e-4), "mismatch vs reference"
    print("KERNEL_OK")
</pallas_src>

<mosaic_0001>
module attributes {stable_mosaic.version = 11 : i64} {
  func.func @_linear_kernel(%arg0: i32, %arg1: i32, %arg2: i32, %arg3: memref<16x32xf32, #tpu.memory_space<vmem>>, %arg4: memref<96x32xf32, #tpu.memory_space<vmem>>, %arg5: memref<1x96xf32, #tpu.memory_space<vmem>>, %arg6: memref<16x96xf32, #tpu.memory_space<vmem>>, %arg7: memref<16x96xf32, #tpu.memory_space<vmem>>) attributes {dimension_semantics = [#tpu.dimension_semantics<parallel>, #tpu.dimension_semantics<parallel>, #tpu.dimension_semantics<arbitrary>], iteration_bounds = array<i64: 1, 1, 1>, scalar_prefetch = 0 : i64, scratch_operands = 1 : i64, tpu.core_type = #tpu.core_type<tc>, window_params = [{transform_indices = @transform_0, window_bounds = array<i64: 16, 32>}, {transform_indices = @transform_1, window_bounds = array<i64: 96, 32>}, {transform_indices = @transform_2, window_bounds = array<i64: 1, 96>}, {transform_indices = @transform_3, window_bounds = array<i64: 16, 96>}]} {
    %c0_i32 = arith.constant 0 : i32
    %0 = arith.cmpi eq, %arg2, %c0_i32 : i32
    %1 = arith.extui %0 : i1 to i32
    %c0_i32_0 = arith.constant 0 : i32
    %2 = arith.cmpi ne, %1, %c0_i32_0 : i32
    scf.if %2 {
      %cst_10 = arith.constant 0.000000e+00 : f32
      %12 = vector.broadcast %cst_10 : f32 to vector<16x96xf32>
      %c0_11 = arith.constant 0 : index
      %c0_12 = arith.constant 0 : index
      %13 = vector.load %arg7[%c0_11, %c0_12] : memref<16x96xf32, #tpu.memory_space<vmem>>, vector<16x96xf32>
      tpu.vector_store %arg7[%c0_11, %c0_12], %12 {strides = array<i32>} : memref<16x96xf32, #tpu.memory_space<vmem>>, vector<16x96xf32>,
    } else {
    }
    %c0 = arith.constant 0 : index
    %c0_1 = arith.constant 0 : index
    %3 = vector.load %arg7[%c0, %c0_1] : memref<16x96xf32, #tpu.memory_space<vmem>>, vector<16x96xf32>
    %c0_2 = arith.constant 0 : index
    %c0_3 = arith.constant 0 : index
    %4 = vector.load %arg3[%c0_2, %c0_3] : memref<16x32xf32, #tpu.memory_space<vmem>>, vector<16x32xf32>
    %c0_4 = arith.constant 0 : index
    %c0_5 = arith.constant 0 : index
    %5 = vector.load %arg4[%c0_4, %c0_5] : memref<96x32xf32, #tpu.memory_space<vmem>>, vector<96x32xf32>
    %cst = arith.constant dense<0.000000e+00> : vector<16x96xf32>
    %6 = tpu.matmul %4, %5, %cst {dimension_numbers = #tpu.dot_dimension_numbers<[1], [1], [0], [0], [0, 0, 1, 0], [], []>} : vector<16x32xf32>, vector<96x32xf32>, vector<16x96xf32> -> vector<16x96xf32>
    %7 = arith.addf %3, %6 : vector<16x96xf32>
    %c0_6 = arith.constant 0 : index
    %c0_7 = arith.constant 0 : index
    %8 = vector.load %arg7[%c0_6, %c0_7] : memref<16x96xf32, #tpu.memory_space<vmem>>, vector<16x96xf32>
    tpu.vector_store %arg7[%c0_6, %c0_7], %7 {strides = array<i32>} : memref<16x96xf32, #tpu.memory_space<vmem>>, vector<16x96xf32>,
    %c0_i32_8 = arith.constant 0 : i32
    %9 = arith.cmpi eq, %arg2, %c0_i32_8 : i32
    %10 = arith.extui %9 : i1 to i32
    %c0_i32_9 = arith.constant 0 : i32
    %11 = arith.cmpi ne, %10, %c0_i32_9 : i32
    scf.if %11 {
      %c0_10 = arith.constant 0 : index
      %c0_11 = arith.constant 0 : index
      %12 = vector.load %arg7[%c0_10, %c0_11] : memref<16x96xf32, #tpu.memory_space<vmem>>, vector<16x96xf32>
      %c0_12 = arith.constant 0 : index
      %c0_13 = arith.constant 0 : index
      %13 = vector.load %arg5[%c0_12, %c0_13] : memref<1x96xf32, #tpu.memory_space<vmem>>, vector<1x96xf32>
      %14 = vector.broadcast %13 : vector<1x96xf32> to vector<16x96xf32>
      %15 = arith.addf %12, %14 : vector<16x96xf32>
      %c0_14 = arith.constant 0 : index
      %c0_15 = arith.constant 0 : index
      %16 = vector.load %arg6[%c0_14, %c0_15] : memref<16x96xf32, #tpu.memory_space<vmem>>, vector<16x96xf32>
      tpu.vector_store %arg6[%c0_14, %c0_15], %15 {strides = array<i32>} : memref<16x96xf32, #tpu.memory_space<vmem>>, vector<16x96xf32>,
    } else {
    }
    return
  }
  func.func @transform_0(%arg0: i32, %arg1: i32, %arg2: i32) -> (i32, i32) {
    %c0_i32 = arith.constant 0 : i32
    return %arg0, %arg2 : i32, i32
  }
  func.func @transform_1(%arg0: i32, %arg1: i32, %arg2: i32) -> (i32, i32) {
    %c0_i32 = arith.constant 0 : i32
    return %arg1, %arg2 : i32, i32
  }
  func.func @transform_2(%arg0: i32, %arg1: i32, %arg2: i32) -> (i32, i32) {
    %c0_i32 = arith.constant 0 : i32
    %c0_i32_0 = arith.constant 0 : i32
    return %c0_i32, %arg1 : i32, i32
  }
  func.func @transform_3(%arg0: i32, %arg1: i32, %arg2: i32) -> (i32, i32) {
    %c0_i32 = arith.constant 0 : i32
    return %arg0, %arg1 : i32, i32
  }
}

</mosaic_0001>

<llo_original>
// kernel: tpu_custom_call.1
$region0: #{tpu_custom_call.1}
  #allocation0 [shape = 'u32[]', space=smem, size = 0x4, offset = 0x4, fixed_abs, tag = 'smem constant byte address 0x4 - core index']
  #allocation1 [shape = 'u32[144,128]{1,0:T(1,128)}', space=vmem, size = 0x12000, scoped, tag = 'internal scratch']
  #allocation2 [shape = 'f32[16,96]{1,0:T(8,128)}', space=vmem, size = 0x2000, scoped, tag = 'scratch operand']
  %s0 = inlined_call_operand.vmem [shape: f32[16,32], index: 0, kind: input, shape index: {}]
  %s1 = inlined_call_operand.vmem [shape: f32[96,32], index: 1, kind: input, shape index: {}]
  %s2 = inlined_call_operand.vmem [shape: f32[1,96], index: 2, kind: input, shape index: {}]
  %s3 = inlined_call_operand.hbm [shape: f32[16,96], index: 3, kind: output, shape index: {}]
  %s4 = sld [smem:[#allocation0]]
  $region30: #{tpu_custom_call.1} parent=0
    _
  %s6 = ssub.s32 1, %s4
  %s7 = scalar_select 0, %s6, %s4
  $region1: #{tpu_custom_call.1} parent=0
    #allocation3 [shape = 'u8[8192]{0}', space=vmem, size = 0x2000, scoped, tag = 'output window, operand 0, single buffered']
    #allocation4 [shape = 's32[1]{0}', space=sflag, size = 0x4, scoped, tag = 'scoped memory for tpu_custom_call.1']
    %8 = vsyncpa [#allocation4], 0
    // Predicated region
    $region2: #{tpu_custom_call.1} parent=1 // pred_check
      _
    $region3: #{tpu_custom_call.1} parent=1 // pred_check_branch
      %10 = sbr.rel (0) target = $region5
    $region4: #{tpu_custom_call.1} parent=1 // pred_region
      _
    $region5: #{tpu_custom_call.1} parent=1 // pred_fallthru
      _
    // Predicated region
    $region6: #{tpu_custom_call.1} parent=1 // pred_check
      _
    $region7: #{tpu_custom_call.1} parent=1 // pred_check_branch
      %12 = sbr.rel (0) target = $region9
    $region8: #{tpu_custom_call.1} parent=1 // pred_region
      _
    $region9: #{tpu_custom_call.1} parent=1 // pred_fallthru
      _
    // Predicated region
    $region10: #{tpu_custom_call.1} parent=1 // pred_check
      _
    $region11: #{tpu_custom_call.1} parent=1 // pred_check_branch
      %14 = sbr.rel (0) target = $region13
    $region12: #{tpu_custom_call.1} parent=1 // pred_region
      _
    $region13: #{tpu_custom_call.1} parent=1 // pred_fallthru
      _
    %p15 = scmp.eq.s32.totalorder 0, 0
    // Predicated region
    $region14: #{tpu_custom_call.1} parent=1 // pred_check
      %p16 = pneg %p15
    $region15: #{tpu_custom_call.1} parent=1 // pred_check_branch
      %18 = sbr.rel (%p16) target = $region17
    $region16: #{tpu_custom_call.1} parent=1 // pred_region
      %vm19 = vcmask 785408
      %20 = vst.msk [vmem:[#allocation2] sm:$0xff] %vm19, 0.0
      %21 = vst.msk [vmem:[#allocation2 + $0x8] sm:$0xff] %vm19, 0.0
    $region17: #{tpu_custom_call.1} parent=1 // pred_fallthru
      _
    %v22 = vld [vmem:[#allocation2] sm:$0xff]
    %v23 = vld [vmem:[#allocation2 + $0x8] sm:$0xff]
    %v24 = vld [vmem:[%s0] sm:$0xff]
    %v25 = vld [vmem:[%s0 + $0x8] sm:$0xff]
    %v26 = vld [vmem:[%s1] sm:$0xff]
    %v27 = vld [vmem:[%s1 + $0x8] sm:$0xff]
    %v28 = vld [vmem:[%s1 + $0x10] sm:$0xff]
    %v29 = vld [vmem:[%s1 + $0x18] sm:$0xff]
    %v30 = vld [vmem:[%s1 + $0x20] sm:$0xff]
    %v31 = vld [vmem:[%s1 + $0x28] sm:$0xff]
    %v32 = vld [vmem:[%s1 + $0x30] sm:$0xff]
    %v33 = vld [vmem:[%s1 + $0x38] sm:$0xff]
    %v34 = vld [vmem:[%s1 + $0x40] sm:$0xff]
    %v35 = vld [vmem:[%s1 + $0x48] sm:$0xff]
    %v36 = vld [vmem:[%s1 + $0x50] sm:$0xff]
    %v37 = vld [vmem:[%s1 + $0x58] sm:$0xff]
    %vm38 = vcmask 261120
    %v40 = vsel %vm38, %v24, 0
    %v43 = vsel %vm38, %v25, 0
    %v46 = vsel %vm38, %v26, 0
    %v49 = vsel %vm38, %v27, 0
    %v52 = vsel %vm38, %v28, 0
    %v55 = vsel %vm38, %v29, 0
    %v58 = vsel %vm38, %v30, 0
    %v61 = vsel %vm38, %v31, 0
    %v64 = vsel %vm38, %v32, 0
    %v67 = vsel %vm38, %v33, 0
    %v70 = vsel %vm38, %v34, 0
    %v73 = vsel %vm38, %v35, 0
    %v76 = vsel %vm38, %v36, 0
    %v79 = vsel %vm38, %v37, 0
    %81 = vmatprep.subr.mxu0 0.0
    %82 = vmatpush1.xpose.msra.mxu0 %v46
    %83 = vmatprep.subr.mxu0 0.0
    %84 = vmatpush1.xpose.msra.mxu0 %v49
    %85 = vmatprep.subr.mxu0 0.0
    %86 = vmatpush1.xpose.msra.mxu0 %v52
    %87 = vmatprep.subr.mxu0 0.0
    %88 = vmatpush1.xpose.msra.mxu0 %v55
    %89 = vmatprep.subr.mxu0 0.0
    %90 = vmatpush1.xpose.msra.mxu0 %v58
    %91 = vmatprep.subr.mxu0 0.0
    %92 = vmatpush1.xpose.msra.mxu0 %v61
    %93 = vmatprep.subr.mxu0 0.0
    %94 = vmatpush1.xpose.msra.mxu0 %v64
    %95 = vmatprep.subr.mxu0 0.0
    %96 = vmatpush1.xpose.msra.mxu0 %v67
    %97 = vmatprep.subr.mxu0 0.0
    %98 = vmatpush1.xpose.msra.mxu0 %v70
    %99 = vmatprep.subr.mxu0 0.0
    %100 = vmatpush1.xpose.msra.mxu0 %v73
    %101 = vmatprep.subr.mxu0 0.0
    %102 = vmatpush1.xpose.msra.mxu0 %v76
    %103 = vmatprep.subr.mxu0 0.0
    %104 = vmatpush1.xpose.msra.mxu0 %v79
    %105 = vmatprep.subr.mxu0 0.0
    %106 = vmatpush1.xpose.msra.mxu0 0.0
    %107 = vmatprep.subr.mxu0 0.0
    %108 = vmatpush1.xpose.msra.mxu0 0.0
    %109 = vmatprep.subr.mxu0 0.0
    %110 = vmatpush1.xpose.msra.mxu0 0.0
    %111 = vmatprep.subr.mxu0 0.0
    %112 = vmatpush1.xpose.msra.mxu0 0.0
    %113 = vmatprep.subr.mxu0 0.0
    %114 = vmatpush1.xpose.msra.mxu0 0.0
    %115 = vmatprep.subr.mxu0 0.0
    %116 = vmatpush1.xpose.msra.mxu0 0.0
    %117 = vmatprep.subr.mxu0 0.0
    %118 = vmatpush1.xpose.msra.mxu0 0.0
    %119 = vmatprep.subr.mxu0 0.0
    %120 = vmatpush1.xpose.msra.mxu0 0.0
    %121 = vmatprep.subr.mxu0 0.0
    %122 = vmatpush1.xpose.msra.mxu0 0.0
    %123 = vmatprep.subr.mxu0 0.0
    %124 = vmatpush1.xpose.msra.mxu0 0.0
    %125 = vmatprep.subr.mxu0 0.0
    %126 = vmatpush1.xpose.msra.mxu0 0.0
    %127 = vmatprep.subr.mxu0 0.0
    %128 = vmatpush1.xpose.msra.mxu0 0.0
    %129 = vmatprep.subr.mxu0 0.0
    %130 = vmatpush1.xpose.msra.mxu0 0.0
    %131 = vmatprep.subr.mxu0 0.0
    %132 = vmatpush1.xpose.msra.mxu0 0.0
    %133 = vmatprep.subr.mxu0 0.0
    %134 = vmatpush1.xpose.msra.mxu0 0.0
    %135 = vmatprep.subr.mxu0 0.0
    %136 = vmatpush1.xpose.msra.mxu0 0.0
    %137 = vmatprep.subr.mxu0 0.0
    %138 = vmatpush1.xpose.msra.mxu0 0.0
    %139 = vmatprep.subr.mxu0 0.0
    %140 = vmatpush1.xpose.msra.mxu0 0.0
    %141 = vmatprep.subr.mxu0 0.0
    %142 = vmatpush1.xpose.msra.mxu0 0.0
    %143 = vmatprep.subr.mxu0 0.0
    %144 = vmatpush1.xpose.msra.mxu0 0.0
    %145 = vmatprep.mubr.f32.mxu0 0.0
    %146 = vmatmul.mubr.f32.gmra.mrb[0].mxu0 %v40
    %v147 = vpop.f32.mrb[0].mxu0
    %v148 = vadd.f32 0.0, %v147
    %v149 = vpop.f32.mrb[0].mxu0
    %150 = vmatprep.mubr.f32.mxu0 0.0
    %151 = vmatmul.mubr.f32.gmra.mrb[0].mxu0 %v43
    %v152 = vpop.f32.mrb[0].mxu0
    %v153 = vadd.f32 0.0, %v152
    %v154 = vpop.f32.mrb[0].mxu0
    %155 = vdwg.mxu0
    %v156 = vadd.f32 %v22, %v148
    %v157 = vadd.f32 %v23, %v153
    %vm158 = vcmask 785408
    %159 = vst.msk [vmem:[#allocation2] sm:$0xff] %vm158, %v156
    %160 = vst.msk [vmem:[#allocation2 + $0x8] sm:$0xff] %vm158, %v157
    // Predicated region
    $region18: #{tpu_custom_call.1} parent=1 // pred_check
      %p161 = pneg %p15
    $region19: #{tpu_custom_call.1} parent=1 // pred_check_branch
      %163 = sbr.rel (%p161) target = $region21
    $region20: #{tpu_custom_call.1} parent=1 // pred_region
      %v164 = vld [vmem:[#allocation2] sm:$0xff]
      %v165 = vld [vmem:[#allocation2 + $0x8] sm:$0xff]
      %v166 = vld [vmem:[%s2] sm:$0x1]
      %v168 = vlaneseq
      %v169 = vshrl.u32 %v168, 7
      %v170 = vsub.s32 0, %v169
      %v171 = vrot.slane %v166, %v170
      %v173 = vadd.f32 %v164, %v171
      %v174 = vadd.f32 %v165, %v171
      %175 = vst.msk [vmem:[#allocation3] sm:$0xff] %vm158, %v173
      %176 = vst.msk [vmem:[#allocation3 + $0x8] sm:$0xff] %vm158, %v174
    $region21: #{tpu_custom_call.1} parent=1 // pred_fallthru
      _
    // Predicated region
    $region22: #{tpu_custom_call.1} parent=1 // pred_check
      _
    $region23: #{tpu_custom_call.1} parent=1 // pred_check_branch
      %178 = sbr.rel (0) target = $region25
    $region24: #{tpu_custom_call.1} parent=1 // pred_region
      %s180 = ssub.s32 256, 256
      %181 = vsyncadd [#allocation4], %s180
      %s182 = sshll.u32 [#allocation3], 4
      %s183 = int_to_ptr.vmem [resolvable:$true] %s182
      %188 = dma.vmem_to_hbm [thread:$0]  %s183, 256, %s3, [#allocation4], 128, 128, 8
    $region25: #{tpu_custom_call.1} parent=1 // pred_fallthru
      _
    // Predicated region
    $region26: #{tpu_custom_call.1} parent=1 // pred_check
      _
    $region27: #{tpu_custom_call.1} parent=1 // pred_check_branch
      %190 = sbr.rel (0) target = $region29
    $region28: #{tpu_custom_call.1} parent=1 // pred_region
      %191 = dma.done [#allocation4], 256
    $region29: #{tpu_custom_call.1} parent=1 // pred_fallthru
      _
    %192 = vsyncpa [#allocation4], 1

</llo_original>
